<compile_context>
chip_gen: v5e
topology: v5e:2x2
jax: 0.10.0
libtpu: 0.0.40
codegen_flags: <defaults>
</compile_context>

<pallas_src>
import jax
import jax.numpy as jnp
from jax import lax
from jax.experimental import pallas as pl
from jax.experimental.pallas import tpu as pltpu
import numpy as np

PADDING_VALUE = 0
EPS = 1e-12  # torch.nn.functional.normalize default eps


def _core_kernel(seq_ids_ref, cand_ids_ref, emb_ref, out_ref):
    """One (batch-block, candidate-tile) grid step.

    seq_ids_ref : (TB, S)   int32 VMEM
    cand_ids_ref: (TB, CT)  int32 VMEM (CT multiple of 128)
    emb_ref     : (V, D)    embedding table, grid-constant VMEM block
    out_ref     : (TB, CT)  f32 scores
    """
    TB, S = seq_ids_ref.shape
    CT = cand_ids_ref.shape[1]
    V, D = emb_ref.shape

    emb = emb_ref[...].astype(jnp.float32)                       # (V, D)

    # ---- mean-pool weights (alpha) from the ids themselves -----------------
    ids = seq_ids_ref[...]                                       # (TB, S)
    mask = (ids != PADDING_VALUE).astype(jnp.float32)            # (TB, S)
    # NOTE: an all-padding row gives 0/0 -> NaN, matching the PyTorch module.
    alpha = mask / jnp.sum(mask, axis=1, keepdims=True)          # (TB, S)

    # ---- fused gather + pooling:  seq[b] = sum_s alpha[b,s] * E[ids[b,s]]
    #      = W[b] @ E  with  W[b,v] = sum_s alpha[b,s] * [ids[b,s] == v]
    iota_v = lax.broadcasted_iota(jnp.int32, (TB, S, V), 2)
    w_terms = jnp.where(ids[:, :, None] == iota_v,
                        alpha[:, :, None], 0.0)                  # (TB, S, V)
    W = jnp.sum(w_terms, axis=1)                                 # (TB, V) sublane reduce
    seq = jnp.dot(W, emb, preferred_element_type=jnp.float32)    # (TB, D) MXU

    # L2 normalize over D:  x / max(||x||, eps) == x * rsqrt(max(ss, eps^2))
    seq_n = seq * lax.rsqrt(
        jnp.maximum(jnp.sum(seq * seq, axis=-1, keepdims=True), EPS * EPS))

    # ---- candidate gather via one-hot matmul --------------------------------
    cids = cand_ids_ref[...]                                     # (TB, CT)
    iota_c = lax.broadcasted_iota(jnp.int32, (TB, CT, V), 2)
    onehot_c = (cids[:, :, None] == iota_c).astype(jnp.float32)  # (TB, CT, V)
    cand = jnp.dot(onehot_c.reshape(TB * CT, V), emb,
                   preferred_element_type=jnp.float32)           # (TB*CT, D) MXU
    cand_n = cand * lax.rsqrt(
        jnp.maximum(jnp.sum(cand * cand, axis=-1, keepdims=True), EPS * EPS))
    cand_n = cand_n.reshape(TB, CT, D)

    # ---- scores[b, c] = <seq_n[b], cand_n[b, c]>  (VPU mul + lane reduce) ---
    scores = jnp.sum(seq_n[:, None, :] * cand_n, axis=-1)        # (TB, CT)
    out_ref[...] = scores


def core_scores(seq_ids, cand_ids, emb_table, *, block_b=8, block_c=1024,
                vmem_limit_bytes=None):
    """scores[b, c] = <normalize(sum_s alpha[b,s] * E[seq_ids[b,s]]),
                       normalize(E[cand_ids[b,c]])>   returned as (B, C)."""
    B, S = seq_ids.shape
    C = cand_ids.shape[1]
    V, D = emb_table.shape

    # --- batch tiling (second-minor dim of the output block) ----------------
    if B <= block_b:
        TB = B
    else:
        TB = max(8, (block_b // 8) * 8)
    nb = -(-B // TB)
    Bp = nb * TB

    # --- candidate tiling: lane-dense (multiple of 128) tiles ----------------
    CT0 = max(128, (block_c // 128) * 128)
    Cp_min = max(128, -(-C // 128) * 128)
    CT = min(CT0, Cp_min)
    Cp = -(-Cp_min // CT) * CT
    nc = Cp // CT

    # --- pad inputs (padding id 0 maps to the zero embedding row) ------------
    if Bp != B:
        seq_ids = jnp.pad(seq_ids, ((0, Bp - B), (0, 0)))
        cand_ids = jnp.pad(cand_ids, ((0, Bp - B), (0, 0)))
    if Cp != C:
        cand_ids = jnp.pad(cand_ids, ((0, 0), (0, Cp - C)))

    out = pl.pallas_call(
        _core_kernel,
        out_shape=jax.ShapeDtypeStruct((Bp, Cp), jnp.float32),
        grid_spec=pltpu.PrefetchScalarGridSpec(
            num_scalar_prefetch=0,
            grid=(nb, nc),
            in_specs=[
                pl.BlockSpec((TB, S), lambda i, j: (i, 0)),   # sequence ids
                pl.BlockSpec((TB, CT), lambda i, j: (i, j)),  # candidate ids
                pl.BlockSpec((V, D), lambda i, j: (0, 0)),    # table, VMEM-resident
            ],
            out_specs=pl.BlockSpec((TB, CT), lambda i, j: (i, j)),
        ),
        compiler_params=pltpu.CompilerParams(
            dimension_semantics=("parallel", "parallel"),
            vmem_limit_bytes=vmem_limit_bytes),
    )(seq_ids.astype(jnp.int32), cand_ids.astype(jnp.int32), emb_table)
    return out[:B, :C]


def core_forward(emb_table, input_seqs, items_to_predict):
    """Full CORE.forward (eval mode: sess_dropout / item_dropout are identity)."""
    # seq_output has a single pooled timestep -> timesteps_to_use = min(T, 1) = 1
    t = min(items_to_predict.shape[1], 1)
    cand_ids = items_to_predict[:, -t:][:, 0]                     # (B, C) last timestep
    scores = core_scores(input_seqs, cand_ids, emb_table)         # (B, C)
    return scores[:, None, :]                                     # (B, 1, C)


def core_forward_ref(emb_table, input_seqs, items_to_predict):
    """Plain-JAX reference mirroring the PyTorch module (eval mode)."""
    x = jnp.take(emb_table, input_seqs, axis=0)
    mask = (input_seqs != PADDING_VALUE).astype(jnp.float32)
    alpha = mask / jnp.sum(mask, axis=1, keepdims=True)
    seq = jnp.sum(alpha[..., None] * x, axis=1)[:, None, :]       # (B, 1, D)
    seq = seq / jnp.maximum(jnp.linalg.norm(seq, axis=-1, keepdims=True), EPS)
    t = min(items_to_predict.shape[1], seq.shape[1])
    seq = seq[:, -t:][:, :, None, :]                              # (B, 1, 1, D)
    items = items_to_predict[:, -t:]                              # (B, 1, C)
    cand = jnp.take(emb_table, items, axis=0)                     # (B, 1, C, D)
    cand = cand / jnp.maximum(jnp.linalg.norm(cand, axis=-1, keepdims=True), EPS)
    return jnp.sum(seq * cand, axis=-1)                           # (B, 1, C)


if __name__ == "__main__":
    num_items, emb_size = 50, 32
    B, S, T, C = 2, 8, 3, 16

    key = jax.random.PRNGKey(0)
    k_emb, k_seq, k_pred = jax.random.split(key, 3)

    # Embedding(num_items + 1, emb_size, padding_idx=0): padding row is zeros.
    emb_table = 0.1 * jax.random.normal(k_emb, (num_items + 1, emb_size), jnp.float32)
    emb_table = emb_table.at[PADDING_VALUE].set(0.0)

    input_seqs = jax.random.randint(k_seq, (B, S), 1, num_items + 1, dtype=jnp.int32)
    # introduce some padding positions
    input_seqs = input_seqs.at[0, :3].set(PADDING_VALUE)
    input_seqs = input_seqs.at[1, :1].set(PADDING_VALUE)

    items_to_predict = jax.random.randint(
        k_pred, (B, T, C), 1, num_items + 1, dtype=jnp.int32)

    scores = jax.block_until_ready(core_forward(emb_table, input_seqs, items_to_predict))
    ref = jax.block_until_ready(core_forward_ref(emb_table, input_seqs, items_to_predict))

    assert scores.shape == (B, 1, C), scores.shape
    # Tolerance leaves headroom for MXU f32 matmul rounding and the rsqrt-based
    # normalisation vs. the plain-JAX sqrt/divide reference.
    np.testing.assert_allclose(np.asarray(scores), np.asarray(ref),
                               rtol=1e-3, atol=1e-4)
    print("KERNEL_OK")
</pallas_src>

<mosaic_0001>
module attributes {stable_mosaic.version = 11 : i64} {
  func.func @_core_kernel(%arg0: i32, %arg1: i32, %arg2: memref<2x8xi32, #tpu.memory_space<vmem>>, %arg3: memref<2x128xi32, #tpu.memory_space<vmem>>, %arg4: memref<51x32xf32, #tpu.memory_space<vmem>>, %arg5: memref<2x128xf32, #tpu.memory_space<vmem>>) attributes {dimension_semantics = [#tpu.dimension_semantics<parallel>, #tpu.dimension_semantics<parallel>], iteration_bounds = array<i64: 1, 1>, scalar_prefetch = 0 : i64, scratch_operands = 0 : i64, tpu.core_type = #tpu.core_type<tc>, window_params = [{transform_indices = @transform_0, window_bounds = array<i64: 2, 8>}, {transform_indices = @transform_1, window_bounds = array<i64: 2, 128>}, {pipeline_mode = #tpu.pipeline_mode<synchronous>, transform_indices = @transform_2, window_bounds = array<i64: 51, 32>}, {transform_indices = @transform_3, window_bounds = array<i64: 2, 128>}]} {
    %c0 = arith.constant 0 : index
    %c0_0 = arith.constant 0 : index
    %0 = vector.load %arg4[%c0, %c0_0] : memref<51x32xf32, #tpu.memory_space<vmem>>, vector<51x32xf32>
    %c0_1 = arith.constant 0 : index
    %c0_2 = arith.constant 0 : index
    %1 = vector.load %arg2[%c0_1, %c0_2] : memref<2x8xi32, #tpu.memory_space<vmem>>, vector<2x8xi32>
    %c0_i32 = arith.constant 0 : i32
    %2 = vector.broadcast %c0_i32 : i32 to vector<2x8xi32>
    %3 = arith.cmpi ne, %1, %2 : vector<2x8xi32>
    %4 = arith.extui %3 : vector<2x8xi1> to vector<2x8xi32>
    %5 = arith.sitofp %4 : vector<2x8xi32> to vector<2x8xf32>
    %cst = arith.constant dense<0.000000e+00> : vector<2xf32>
    %6 = vector.multi_reduction <add>, %5, %cst [1] : vector<2x8xf32> to vector<2xf32>
    %7 = vector.shape_cast %6 : vector<2xf32> to vector<2x1xf32>
    %8 = vector.broadcast %7 : vector<2x1xf32> to vector<2x8xf32>
    %9 = arith.divf %5, %8 : vector<2x8xf32>
    %10 = tpu.iota {dimensions = array<i32: 2>} : vector<2x8x51xi32>
    %11 = vector.shape_cast %1 : vector<2x8xi32> to vector<2x8x1xi32>
    %12 = vector.broadcast %11 : vector<2x8x1xi32> to vector<2x8x51xi32>
    %13 = arith.cmpi eq, %12, %10 : vector<2x8x51xi32>
    %14 = vector.shape_cast %9 : vector<2x8xf32> to vector<2x8x1xf32>
    %cst_3 = arith.constant 0.000000e+00 : f32
    %15 = vector.shape_cast %14 : vector<2x8x1xf32> to vector<2x8x1xf32>
    %16 = vector.broadcast %15 : vector<2x8x1xf32> to vector<2x8x51xf32>
    %17 = vector.broadcast %cst_3 : f32 to vector<2x8x51xf32>
    %18 = arith.select %13, %16, %17 : vector<2x8x51xi1>, vector<2x8x51xf32>
    %cst_4 = arith.constant dense<0.000000e+00> : vector<2x51xf32>
    %19 = vector.multi_reduction <add>, %18, %cst_4 [1] : vector<2x8x51xf32> to vector<2x51xf32>
    %cst_5 = arith.constant dense<0.000000e+00> : vector<2x32xf32>
    %20 = tpu.matmul %19, %0, %cst_5 {dimension_numbers = #tpu.dot_dimension_numbers<[1], [0], [0], [1], [0, 0, 1, 1], [], []>} : vector<2x51xf32>, vector<51x32xf32>, vector<2x32xf32> -> vector<2x32xf32>
    %21 = arith.mulf %20, %20 : vector<2x32xf32>
    %cst_6 = arith.constant dense<0.000000e+00> : vector<2xf32>
    %22 = vector.multi_reduction <add>, %21, %cst_6 [1] : vector<2x32xf32> to vector<2xf32>
    %23 = vector.shape_cast %22 : vector<2xf32> to vector<2x1xf32>
    %cst_7 = arith.constant 1.000000e-24 : f32
    %24 = vector.broadcast %cst_7 : f32 to vector<2x1xf32>
    %25 = arith.maximumf %23, %24 : vector<2x1xf32>
    %26 = math.rsqrt %25 : vector<2x1xf32>
    %27 = vector.broadcast %26 : vector<2x1xf32> to vector<2x32xf32>
    %28 = arith.mulf %20, %27 : vector<2x32xf32>
    %c0_8 = arith.constant 0 : index
    %c0_9 = arith.constant 0 : index
    %29 = vector.load %arg3[%c0_8, %c0_9] : memref<2x128xi32, #tpu.memory_space<vmem>>, vector<2x128xi32>
    %30 = tpu.iota {dimensions = array<i32: 2>} : vector<2x128x51xi32>
    %31 = vector.shape_cast %29 : vector<2x128xi32> to vector<2x128x1xi32>
    %32 = vector.broadcast %31 : vector<2x128x1xi32> to vector<2x128x51xi32>
    %33 = arith.cmpi eq, %32, %30 : vector<2x128x51xi32>
    %34 = arith.extui %33 : vector<2x128x51xi1> to vector<2x128x51xi32>
    %35 = arith.sitofp %34 : vector<2x128x51xi32> to vector<2x128x51xf32>
    %36 = vector.shape_cast %35 : vector<2x128x51xf32> to vector<256x51xf32>
    %cst_10 = arith.constant dense<0.000000e+00> : vector<256x32xf32>
    %37 = tpu.matmul %36, %0, %cst_10 {dimension_numbers = #tpu.dot_dimension_numbers<[1], [0], [0], [1], [0, 0, 1, 1], [], []>} : vector<256x51xf32>, vector<51x32xf32>, vector<256x32xf32> -> vector<256x32xf32>
    %38 = arith.mulf %37, %37 : vector<256x32xf32>
    %cst_11 = arith.constant dense<0.000000e+00> : vector<256xf32>
    %39 = vector.multi_reduction <add>, %38, %cst_11 [1] : vector<256x32xf32> to vector<256xf32>
    %40 = vector.shape_cast %39 : vector<256xf32> to vector<256x1xf32>
    %cst_12 = arith.constant 1.000000e-24 : f32
    %41 = vector.broadcast %cst_12 : f32 to vector<256x1xf32>
    %42 = arith.maximumf %40, %41 : vector<256x1xf32>
    %43 = math.rsqrt %42 : vector<256x1xf32>
    %44 = vector.broadcast %43 : vector<256x1xf32> to vector<256x32xf32>
    %45 = arith.mulf %37, %44 : vector<256x32xf32>
    %46 = vector.shape_cast %45 : vector<256x32xf32> to vector<2x128x32xf32>
    %47 = vector.shape_cast %28 : vector<2x32xf32> to vector<2x1x32xf32>
    %48 = vector.broadcast %47 : vector<2x1x32xf32> to vector<2x128x32xf32>
    %49 = arith.mulf %48, %46 : vector<2x128x32xf32>
    %cst_13 = arith.constant dense<0.000000e+00> : vector<2x128xf32>
    %50 = vector.multi_reduction <add>, %49, %cst_13 [2] : vector<2x128x32xf32> to vector<2x128xf32>
    %c0_14 = arith.constant 0 : index
    %c0_15 = arith.constant 0 : index
    %51 = vector.load %arg5[%c0_14, %c0_15] : memref<2x128xf32, #tpu.memory_space<vmem>>, vector<2x128xf32>
    tpu.vector_store %arg5[%c0_14, %c0_15], %50 {strides = array<i32>} : memref<2x128xf32, #tpu.memory_space<vmem>>, vector<2x128xf32>,
    return
  }
  func.func @transform_0(%arg0: i32, %arg1: i32) -> (i32, i32) {
    %c0_i32 = arith.constant 0 : i32
    %c0_i32_0 = arith.constant 0 : i32
    return %arg0, %c0_i32 : i32, i32
  }
  func.func @transform_1(%arg0: i32, %arg1: i32) -> (i32, i32) {
    %c0_i32 = arith.constant 0 : i32
    return %arg0, %arg1 : i32, i32
  }
  func.func @transform_2(%arg0: i32, %arg1: i32) -> (i32, i32) {
    %c0_i32 = arith.constant 0 : i32
    %c0_i32_0 = arith.constant 0 : i32
    %c0_i32_1 = arith.constant 0 : i32
    return %c0_i32, %c0_i32_0 : i32, i32
  }
  func.func @transform_3(%arg0: i32, %arg1: i32) -> (i32, i32) {
    %c0_i32 = arith.constant 0 : i32
    return %arg0, %arg1 : i32, i32
  }
}

</mosaic_0001>

<llo_original>
// kernel: tpu_custom_call.1
$region0: #{tpu_custom_call.1}
  #allocation0 [shape = 'u32[]', space=smem, size = 0x4, offset = 0x4, fixed_abs, tag = 'smem constant byte address 0x4 - core index']
  #allocation1 [shape = 'u32[72,128]{1,0:T(1,128)}', space=vmem, size = 0x9000, scoped, tag = 'internal scratch']
  %s0 = inlined_call_operand.vmem [shape: s32[2,8], index: 0, kind: input, shape index: {}]
  %s1 = inlined_call_operand.vmem [shape: s32[2,128], index: 1, kind: input, shape index: {}]
  %s2 = inlined_call_operand.vmem [shape: f32[51,32], index: 2, kind: input, shape index: {}]
  %s3 = inlined_call_operand.hbm [shape: f32[2,128], index: 3, kind: output, shape index: {}]
  %s4 = sld [smem:[#allocation0]]
  $region22: #{tpu_custom_call.1} parent=0
    _
  %s6 = ssub.s32 1, %s4
  %s7 = scalar_select 0, %s6, %s4
  $region1: #{tpu_custom_call.1} parent=0
    #allocation2 [shape = 'u8[1024]{0}', space=vmem, size = 0x400, scoped, tag = 'output window, operand 0, single buffered']
    #allocation3 [shape = 's32[1]{0}', space=sflag, size = 0x4, scoped, tag = 'scoped memory for tpu_custom_call.1']
    %8 = vsyncpa [#allocation3], 0
    // Predicated region
    $region2: #{tpu_custom_call.1} parent=1 // pred_check
      _
    $region3: #{tpu_custom_call.1} parent=1 // pred_check_branch
      %10 = sbr.rel (0) target = $region5
    $region4: #{tpu_custom_call.1} parent=1 // pred_region
      _
    $region5: #{tpu_custom_call.1} parent=1 // pred_fallthru
      _
    // Predicated region
    $region6: #{tpu_custom_call.1} parent=1 // pred_check
      _
    $region7: #{tpu_custom_call.1} parent=1 // pred_check_branch
      %12 = sbr.rel (0) target = $region9
    $region8: #{tpu_custom_call.1} parent=1 // pred_region
      _
    $region9: #{tpu_custom_call.1} parent=1 // pred_fallthru
      _
    // Predicated region
    $region10: #{tpu_custom_call.1} parent=1 // pred_check
      _
    $region11: #{tpu_custom_call.1} parent=1 // pred_check_branch
      %14 = sbr.rel (0) target = $region13
    $region12: #{tpu_custom_call.1} parent=1 // pred_region
      _
    $region13: #{tpu_custom_call.1} parent=1 // pred_fallthru
      _
    %v15 = vld [vmem:[%s2] sm:$0xff]
    %v16 = vld [vmem:[%s2 + $0x8] sm:$0xff]
    %v17 = vld [vmem:[%s2 + $0x10] sm:$0xff]
    %v18 = vld [vmem:[%s2 + $0x18] sm:$0xff]
    %v19 = vld [vmem:[%s2 + $0x20] sm:$0xff]
    %v20 = vld [vmem:[%s2 + $0x28] sm:$0xff]
    %v21 = vld [vmem:[%s2 + $0x30] sm:$0x7]
    %v22 = vld [vmem:[%s0] sm:$0x3]
    %vm23 = vcmp.ne.s32.totalorder %v22, 0
    %v24 = vsel %vm23, 1, 0
    %v25 = vcvt.s32.f32 %v24
    %vm26 = vcmask 58368
    %v27 = vsel %vm26, %v25, 0.0
    %28 = vadd.xlane.f32.xlu0 %v27
    %v29 = vpop.xlane.xlu0 %28
    %v30 = vrcp.pop %v29
    %v31 = vmul.f32 %v29, %v30
    %v32 = vsub.f32 1.0, %v31
    %v33 = vmul.f32 %v30, %v32
    %v34 = vadd.f32 %v30, %v33
    %vm35 = vweird.f32 %v29
    %vm36 = vweird.f32 %v30
    %vm37 = vmor %vm35, %vm36
    %v38 = vsel %vm37, %v30, %v34
    %v39 = vand.u32 2147483647, %v29
    %vm40 = vcmp.eq.f32.partialorder %v39, 8.507059e+37
    %v41 = vand.u32 %v29, 2147483648
    %v42 = vor.u32 1.1754944e-38, %v41
    %v43 = vsel %vm40, %v42, %v38
    %v44 = vmul.f32 %v25, %v43
    %v45 = vlaneseq
    %v46 = vand.u32 %v45, 127
    %v47 = vperm.slane %v22, 0
    %v48 = vlaneseq
    %v49 = vshrl.u32 %v48, 7
    %51 = vset.pattern.permute.xlu0 %v49
    %52 = vperm.xlu0 %51, %v47
    %v53 = vpop.permute.xlu0 %52
    %v54 = vperm.slane %v22, 1
    %v55 = vlaneseq
    %v56 = vshrl.u32 %v55, 7
    %58 = vset.pattern.permute.xlu0 %v56
    %59 = vperm.xlu0 %58, %v54
    %v60 = vpop.permute.xlu0 %59
    %vm61 = vcmp.eq.s32.totalorder %v53, %v46
    %vm62 = vcmp.eq.s32.totalorder %v60, %v46
    %v63 = vperm.slane %v44, 0
    %v64 = vlaneseq
    %v65 = vshrl.u32 %v64, 7
    %67 = vset.pattern.permute.xlu0 %v65
    %68 = vperm.xlu0 %67, %v63
    %v69 = vpop.permute.xlu0 %68
    %v70 = vperm.slane %v44, 1
    %v71 = vlaneseq
    %v72 = vshrl.u32 %v71, 7
    %74 = vset.pattern.permute.xlu0 %v72
    %75 = vperm.xlu0 %74, %v70
    %v76 = vpop.permute.xlu0 %75
    %v77 = vsel %vm61, %v69, 0.0
    %v78 = vsel %vm62, %v76, 0.0
    %vm79 = vcmask 416768
    %v80 = vsel %vm79, %v77, 0.0
    %v81 = vrot.slane %v80, 4
    %v82 = vadd.f32 %v80, %v81
    %v83 = vrot.slane %v82, 2
    %v84 = vadd.f32 %v82, %v83
    %v85 = vrot.slane %v84, 1
    %v86 = vadd.f32 %v84, %v85
    %v87 = vsel %vm79, %v78, 0.0
    %v88 = vrot.slane %v87, 4
    %v89 = vadd.f32 %v87, %v88
    %v90 = vrot.slane %v89, 2
    %v91 = vadd.f32 %v89, %v90
    %v92 = vrot.slane %v91, 1
    %v93 = vadd.f32 %v91, %v92
    %vm96 = vcmask 1041409
    %v97 = vsel %vm96, %v93, %v86
    %v98 = vsel %vm79, %v97, 0
    %vm100 = vcmask 1042432
    %v102 = vsel %vm100, %v21, 0
    %104 = vmatpush.msra.mxu0 0.0
    %105 = vmatpush.msra.mxu0 0.0
    %106 = vmatpush.msra.mxu0 0.0
    %107 = vmatpush.msra.mxu0 0.0
    %108 = vmatpush.msra.mxu0 0.0
    %109 = vmatpush.msra.mxu0 0.0
    %110 = vmatpush.msra.mxu0 0.0
    %111 = vmatpush.msra.mxu0 0.0
    %112 = vmatpush.msra.mxu0 0.0
    %113 = vmatpush.msra.mxu0 %v102
    %114 = vmatpush.msra.mxu0 %v20
    %115 = vmatpush.msra.mxu0 %v19
    %116 = vmatpush.msra.mxu0 %v18
    %117 = vmatpush.msra.mxu0 %v17
    %118 = vmatpush.msra.mxu0 %v16
    %119 = vmatpush.msra.mxu0 %v15
    %120 = vmatmul.f32.gmra.mxu0 %v98
    %v121 = vpop.f32.mrf.mxu0
    %v122 = vadd.f32 0.0, %v121
    %123 = vdwg.mxu0
    %v124 = vmul.f32 %v122, %v122
    %vm125 = vcmask 254976
    %v126 = vsel %vm125, %v124, 0.0
    %127 = vadd.xlane.f32.xlu0 %v126
    %v128 = vpop.xlane.xlu0 %127
    %v129 = vmax.f32 %v128, 1e-24
    %v130 = vrsqrt.pop %v129
    %v131 = vmul.f32 %v130, %v129
    %v132 = vmul.f32 %v131, %v130
    %v133 = vmul.f32 0.5, %v132
    %v134 = vsub.f32 1.5, %v133
    %v135 = vmul.f32 %v130, %v134
    %vm136 = vweird.f32 %v129
    %vm137 = vweird.f32 %v130
    %vm138 = vmor %vm136, %vm137
    %v139 = vsel %vm138, %v130, %v135
    %v140 = vmul.f32 %v122, %v139
    %v141 = vld [vmem:[%s1] sm:$0x3]
    %v142 = vperm.slane %v141, 0
    %v143 = vlaneseq
    %v144 = vshrl.u32 %v143, 7
    %146 = vset.pattern.permute.xlu0 %v144
    %147 = vperm.xlu0 %146, %v142
    %v148 = vpop.permute.xlu0 %147
    %v149 = vlaneseq
    %v150 = vshrl.u32 %v149, 7
    %v151 = vadd.s32 %v150, 8
    %152 = vset.pattern.permute.xlu0 %v151
    %153 = vperm.xlu0 %152, %v142
    %v154 = vpop.permute.xlu0 %153
    %v155 = vlaneseq
    %v156 = vshrl.u32 %v155, 7
    %v157 = vadd.s32 %v156, 16
    %158 = vset.pattern.permute.xlu0 %v157
    %159 = vperm.xlu0 %158, %v142
    %v160 = vpop.permute.xlu0 %159
    %v161 = vlaneseq
    %v162 = vshrl.u32 %v161, 7
    %v163 = vadd.s32 %v162, 24
    %164 = vset.pattern.permute.xlu0 %v163
    %165 = vperm.xlu0 %164, %v142
    %v166 = vpop.permute.xlu0 %165
    %v167 = vlaneseq
    %v168 = vshrl.u32 %v167, 7
    %v169 = vadd.s32 %v168, 32
    %170 = vset.pattern.permute.xlu0 %v169
    %171 = vperm.xlu0 %170, %v142
    %v172 = vpop.permute.xlu0 %171
    %v173 = vlaneseq
    %v174 = vshrl.u32 %v173, 7
    %v175 = vadd.s32 %v174, 40
    %176 = vset.pattern.permute.xlu0 %v175
    %177 = vperm.xlu0 %176, %v142
    %v178 = vpop.permute.xlu0 %177
    %v179 = vlaneseq
    %v180 = vshrl.u32 %v179, 7
    %v181 = vadd.s32 %v180, 48
    %182 = vset.pattern.permute.xlu0 %v181
    %183 = vperm.xlu0 %182, %v142
    %v184 = vpop.permute.xlu0 %183
    %v185 = vlaneseq
    %v186 = vshrl.u32 %v185, 7
    %v187 = vadd.s32 %v186, 56
    %188 = vset.pattern.permute.xlu0 %v187
    %189 = vperm.xlu0 %188, %v142
    %v190 = vpop.permute.xlu0 %189
    %v191 = vlaneseq
    %v192 = vshrl.u32 %v191, 7
    %v193 = vadd.s32 %v192, 64
    %194 = vset.pattern.permute.xlu0 %v193
    %195 = vperm.xlu0 %194, %v142
    %v196 = vpop.permute.xlu0 %195
    %v197 = vlaneseq
    %v198 = vshrl.u32 %v197, 7
    %v199 = vadd.s32 %v198, 72
    %200 = vset.pattern.permute.xlu0 %v199
    %201 = vperm.xlu0 %200, %v142
    %v202 = vpop.permute.xlu0 %201
    %v203 = vlaneseq
    %v204 = vshrl.u32 %v203, 7
    %v205 = vadd.s32 %v204, 80
    %206 = vset.pattern.permute.xlu0 %v205
    %207 = vperm.xlu0 %206, %v142
    %v208 = vpop.permute.xlu0 %207
    %v209 = vlaneseq
    %v210 = vshrl.u32 %v209, 7
    %v211 = vadd.s32 %v210, 88
    %212 = vset.pattern.permute.xlu0 %v211
    %213 = vperm.xlu0 %212, %v142
    %v214 = vpop.permute.xlu0 %213
    %v215 = vlaneseq
    %v216 = vshrl.u32 %v215, 7
    %v217 = vadd.s32 %v216, 96
    %218 = vset.pattern.permute.xlu0 %v217
    %219 = vperm.xlu0 %218, %v142
    %v220 = vpop.permute.xlu0 %219
    %v221 = vlaneseq
    %v222 = vshrl.u32 %v221, 7
    %v223 = vadd.s32 %v222, 104
    %224 = vset.pattern.permute.xlu0 %v223
    %225 = vperm.xlu0 %224, %v142
    %v226 = vpop.permute.xlu0 %225
    %v227 = vlaneseq
    %v228 = vshrl.u32 %v227, 7
    %v229 = vadd.s32 %v228, 112
    %230 = vset.pattern.permute.xlu0 %v229
    %231 = vperm.xlu0 %230, %v142
    %v232 = vpop.permute.xlu0 %231
    %v233 = vlaneseq
    %v234 = vshrl.u32 %v233, 7
    %v235 = vadd.s32 %v234, 120
    %236 = vset.pattern.permute.xlu0 %v235
    %237 = vperm.xlu0 %236, %v142
    %v238 = vpop.permute.xlu0 %237
    %v239 = vperm.slane %v141, 1
    %v240 = vlaneseq
    %v241 = vshrl.u32 %v240, 7
    %243 = vset.pattern.permute.xlu0 %v241
    %244 = vperm.xlu0 %243, %v239
    %v245 = vpop.permute.xlu0 %244
    %v246 = vlaneseq
    %v247 = vshrl.u32 %v246, 7
    %v248 = vadd.s32 %v247, 8
    %249 = vset.pattern.permute.xlu0 %v248
    %250 = vperm.xlu0 %249, %v239
    %v251 = vpop.permute.xlu0 %250
    %v252 = vlaneseq
    %v253 = vshrl.u32 %v252, 7
    %v254 = vadd.s32 %v253, 16
    %255 = vset.pattern.permute.xlu0 %v254
    %256 = vperm.xlu0 %255, %v239
    %v257 = vpop.permute.xlu0 %256
    %v258 = vlaneseq
    %v259 = vshrl.u32 %v258, 7
    %v260 = vadd.s32 %v259, 24
    %261 = vset.pattern.permute.xlu0 %v260
    %262 = vperm.xlu0 %261, %v239
    %v263 = vpop.permute.xlu0 %262
    %v264 = vlaneseq
    %v265 = vshrl.u32 %v264, 7
    %v266 = vadd.s32 %v265, 32
    %267 = vset.pattern.permute.xlu0 %v266
    %268 = vperm.xlu0 %267, %v239
    %v269 = vpop.permute.xlu0 %268
    %v270 = vlaneseq
    %v271 = vshrl.u32 %v270, 7
    %v272 = vadd.s32 %v271, 40
    %273 = vset.pattern.permute.xlu0 %v272
    %274 = vperm.xlu0 %273, %v239
    %v275 = vpop.permute.xlu0 %274
    %v276 = vlaneseq
    %v277 = vshrl.u32 %v276, 7
    %v278 = vadd.s32 %v277, 48
    %279 = vset.pattern.permute.xlu0 %v278
    %280 = vperm.xlu0 %279, %v239
    %v281 = vpop.permute.xlu0 %280
    %v282 = vlaneseq
    %v283 = vshrl.u32 %v282, 7
    %v284 = vadd.s32 %v283, 56
    %285 = vset.pattern.permute.xlu0 %v284
    %286 = vperm.xlu0 %285, %v239
    %v287 = vpop.permute.xlu0 %286
    %v288 = vlaneseq
    %v289 = vshrl.u32 %v288, 7
    %v290 = vadd.s32 %v289, 64
    %291 = vset.pattern.permute.xlu0 %v290
    %292 = vperm.xlu0 %291, %v239
    %v293 = vpop.permute.xlu0 %292
    %v294 = vlaneseq
    %v295 = vshrl.u32 %v294, 7
    %v296 = vadd.s32 %v295, 72
    %297 = vset.pattern.permute.xlu0 %v296
    %298 = vperm.xlu0 %297, %v239
    %v299 = vpop.permute.xlu0 %298
    %v300 = vlaneseq
    %v301 = vshrl.u32 %v300, 7
    %v302 = vadd.s32 %v301, 80
    %303 = vset.pattern.permute.xlu0 %v302
    %304 = vperm.xlu0 %303, %v239
    %v305 = vpop.permute.xlu0 %304
    %v306 = vlaneseq
    %v307 = vshrl.u32 %v306, 7
    %v308 = vadd.s32 %v307, 88
    %309 = vset.pattern.permute.xlu0 %v308
    %310 = vperm.xlu0 %309, %v239
    %v311 = vpop.permute.xlu0 %310
    %v312 = vlaneseq
    %v313 = vshrl.u32 %v312, 7
    %v314 = vadd.s32 %v313, 96
    %315 = vset.pattern.permute.xlu0 %v314
    %316 = vperm.xlu0 %315, %v239
    %v317 = vpop.permute.xlu0 %316
    %v318 = vlaneseq
    %v319 = vshrl.u32 %v318, 7
    %v320 = vadd.s32 %v319, 104
    %321 = vset.pattern.permute.xlu0 %v320
    %322 = vperm.xlu0 %321, %v239
    %v323 = vpop.permute.xlu0 %322
    %v324 = vlaneseq
    %v325 = vshrl.u32 %v324, 7
    %v326 = vadd.s32 %v325, 112
    %327 = vset.pattern.permute.xlu0 %v326
    %328 = vperm.xlu0 %327, %v239
    %v329 = vpop.permute.xlu0 %328
    %v330 = vlaneseq
    %v331 = vshrl.u32 %v330, 7
    %v332 = vadd.s32 %v331, 120
    %333 = vset.pattern.permute.xlu0 %v332
    %334 = vperm.xlu0 %333, %v239
    %v335 = vpop.permute.xlu0 %334
    %vm336 = vcmp.eq.s32.totalorder %v148, %v46
    %vm337 = vcmp.eq.s32.totalorder %v154, %v46
    %vm338 = vcmp.eq.s32.totalorder %v160, %v46
    %vm339 = vcmp.eq.s32.totalorder %v166, %v46
    %vm340 = vcmp.eq.s32.totalorder %v172, %v46
    %vm341 = vcmp.eq.s32.totalorder %v178, %v46
    %vm342 = vcmp.eq.s32.totalorder %v184, %v46
    %vm343 = vcmp.eq.s32.totalorder %v190, %v46
    %vm344 = vcmp.eq.s32.totalorder %v196, %v46
    %vm345 = vcmp.eq.s32.totalorder %v202, %v46
    %vm346 = vcmp.eq.s32.totalorder %v208, %v46
    %vm347 = vcmp.eq.s32.totalorder %v214, %v46
    %vm348 = vcmp.eq.s32.totalorder %v220, %v46
    %vm349 = vcmp.eq.s32.totalorder %v226, %v46
    %vm350 = vcmp.eq.s32.totalorder %v232, %v46
    %vm351 = vcmp.eq.s32.totalorder %v238, %v46
    %vm352 = vcmp.eq.s32.totalorder %v245, %v46
    %vm353 = vcmp.eq.s32.totalorder %v251, %v46
    %vm354 = vcmp.eq.s32.totalorder %v257, %v46
    %vm355 = vcmp.eq.s32.totalorder %v263, %v46
    %vm356 = vcmp.eq.s32.totalorder %v269, %v46
    %vm357 = vcmp.eq.s32.totalorder %v275, %v46
    %vm358 = vcmp.eq.s32.totalorder %v281, %v46
    %vm359 = vcmp.eq.s32.totalorder %v287, %v46
    %vm360 = vcmp.eq.s32.totalorder %v293, %v46
    %vm361 = vcmp.eq.s32.totalorder %v299, %v46
    %vm362 = vcmp.eq.s32.totalorder %v305, %v46
    %vm363 = vcmp.eq.s32.totalorder %v311, %v46
    %vm364 = vcmp.eq.s32.totalorder %v317, %v46
    %vm365 = vcmp.eq.s32.totalorder %v323, %v46
    %vm366 = vcmp.eq.s32.totalorder %v329, %v46
    %vm367 = vcmp.eq.s32.totalorder %v335, %v46
    %v368 = vsel %vm336, 1, 0
    %v369 = vsel %vm337, 1, 0
    %v370 = vsel %vm338, 1, 0
    %v371 = vsel %vm339, 1, 0
    %v372 = vsel %vm340, 1, 0
    %v373 = vsel %vm341, 1, 0
    %v374 = vsel %vm342, 1, 0
    %v375 = vsel %vm343, 1, 0
    %v376 = vsel %vm344, 1, 0
    %v377 = vsel %vm345, 1, 0
    %v378 = vsel %vm346, 1, 0
    %v379 = vsel %vm347, 1, 0
    %v380 = vsel %vm348, 1, 0
    %v381 = vsel %vm349, 1, 0
    %v382 = vsel %vm350, 1, 0
    %v383 = vsel %vm351, 1, 0
    %v384 = vsel %vm352, 1, 0
    %v385 = vsel %vm353, 1, 0
    %v386 = vsel %vm354, 1, 0
    %v387 = vsel %vm355, 1, 0
    %v388 = vsel %vm356, 1, 0
    %v389 = vsel %vm357, 1, 0
    %v390 = vsel %vm358, 1, 0
    %v391 = vsel %vm359, 1, 0
    %v392 = vsel %vm360, 1, 0
    %v393 = vsel %vm361, 1, 0
    %v394 = vsel %vm362, 1, 0
    %v395 = vsel %vm363, 1, 0
    %v396 = vsel %vm364, 1, 0
    %v397 = vsel %vm365, 1, 0
    %v398 = vsel %vm366, 1, 0
    %v399 = vsel %vm367, 1, 0
    %v400 = vcvt.s32.f32 %v368
    %v401 = vcvt.s32.f32 %v369
    %v402 = vcvt.s32.f32 %v370
    %v403 = vcvt.s32.f32 %v371
    %v404 = vcvt.s32.f32 %v372
    %v405 = vcvt.s32.f32 %v373
    %v406 = vcvt.s32.f32 %v374
    %v407 = vcvt.s32.f32 %v375
    %v408 = vcvt.s32.f32 %v376
    %v409 = vcvt.s32.f32 %v377
    %v410 = vcvt.s32.f32 %v378
    %v411 = vcvt.s32.f32 %v379
    %v412 = vcvt.s32.f32 %v380
    %v413 = vcvt.s32.f32 %v381
    %v414 = vcvt.s32.f32 %v382
    %v415 = vcvt.s32.f32 %v383
    %v416 = vcvt.s32.f32 %v384
    %v417 = vcvt.s32.f32 %v385
    %v418 = vcvt.s32.f32 %v386
    %v419 = vcvt.s32.f32 %v387
    %v420 = vcvt.s32.f32 %v388
    %v421 = vcvt.s32.f32 %v389
    %v422 = vcvt.s32.f32 %v390
    %v423 = vcvt.s32.f32 %v391
    %v424 = vcvt.s32.f32 %v392
    %v425 = vcvt.s32.f32 %v393
    %v426 = vcvt.s32.f32 %v394
    %v427 = vcvt.s32.f32 %v395
    %v428 = vcvt.s32.f32 %v396
    %v429 = vcvt.s32.f32 %v397
    %v430 = vcvt.s32.f32 %v398
    %v431 = vcvt.s32.f32 %v399
    %v433 = vsel %vm79, %v400, 0
    %v436 = vsel %vm79, %v401, 0
    %v439 = vsel %vm79, %v402, 0
    %v442 = vsel %vm79, %v403, 0
    %v445 = vsel %vm79, %v404, 0
    %v448 = vsel %vm79, %v405, 0
    %v451 = vsel %vm79, %v406, 0
    %v454 = vsel %vm79, %v407, 0
    %v457 = vsel %vm79, %v408, 0
    %v460 = vsel %vm79, %v409, 0
    %v463 = vsel %vm79, %v410, 0
    %v466 = vsel %vm79, %v411, 0
    %v469 = vsel %vm79, %v412, 0
    %v472 = vsel %vm79, %v413, 0
    %v475 = vsel %vm79, %v414, 0
    %v478 = vsel %vm79, %v415, 0
    %v481 = vsel %vm79, %v416, 0
    %v484 = vsel %vm79, %v417, 0
    %v487 = vsel %vm79, %v418, 0
    %v490 = vsel %vm79, %v419, 0
    %v493 = vsel %vm79, %v420, 0
    %v496 = vsel %vm79, %v421, 0
    %v499 = vsel %vm79, %v422, 0
    %v502 = vsel %vm79, %v423, 0
    %v505 = vsel %vm79, %v424, 0
    %v508 = vsel %vm79, %v425, 0
    %v511 = vsel %vm79, %v426, 0
    %v514 = vsel %vm79, %v427, 0
    %v517 = vsel %vm79, %v428, 0
    %v520 = vsel %vm79, %v429, 0
    %v523 = vsel %vm79, %v430, 0
    %v526 = vsel %vm79, %v431, 0
    %528 = vmatpush.msra.mxu0 0.0
    %529 = vmatpush.msra.mxu0 0.0
    %530 = vmatpush.msra.mxu0 0.0
    %531 = vmatpush.msra.mxu0 0.0
    %532 = vmatpush.msra.mxu0 0.0
    %533 = vmatpush.msra.mxu0 0.0
    %534 = vmatpush.msra.mxu0 0.0
    %535 = vmatpush.msra.mxu0 0.0
    %536 = vmatpush.msra.mxu0 0.0
    %537 = vmatpush.msra.mxu0 %v102
    %538 = vmatpush.msra.mxu0 %v20
    %539 = vmatpush.msra.mxu0 %v19
    %540 = vmatpush.msra.mxu0 %v18
    %541 = vmatpush.msra.mxu0 %v17
    %542 = vmatpush.msra.mxu0 %v16
    %543 = vmatpush.msra.mxu0 %v15
    %544 = vmatmul.f32.gmra.mxu0 %v433
    %v545 = vpop.f32.mrf.mxu0
    %v546 = vadd.f32 0.0, %v545
    %547 = vmatmul.f32.gmra.mxu0 %v436
    %v548 = vpop.f32.mrf.mxu0
    %v549 = vadd.f32 0.0, %v548
    %550 = vmatmul.f32.gmra.mxu0 %v439
    %v551 = vpop.f32.mrf.mxu0
    %v552 = vadd.f32 0.0, %v551
    %553 = vmatmul.f32.gmra.mxu0 %v442
    %v554 = vpop.f32.mrf.mxu0
    %v555 = vadd.f32 0.0, %v554
    %556 = vmatmul.f32.gmra.mxu0 %v445
    %v557 = vpop.f32.mrf.mxu0
    %v558 = vadd.f32 0.0, %v557
    %559 = vmatmul.f32.gmra.mxu0 %v448
    %v560 = vpop.f32.mrf.mxu0
    %v561 = vadd.f32 0.0, %v560
    %562 = vmatmul.f32.gmra.mxu0 %v451
    %v563 = vpop.f32.mrf.mxu0
    %v564 = vadd.f32 0.0, %v563
    %565 = vmatmul.f32.gmra.mxu0 %v454
    %v566 = vpop.f32.mrf.mxu0
    %v567 = vadd.f32 0.0, %v566
    %568 = vmatmul.f32.gmra.mxu0 %v457
    %v569 = vpop.f32.mrf.mxu0
    %v570 = vadd.f32 0.0, %v569
    %571 = vmatmul.f32.gmra.mxu0 %v460
    %v572 = vpop.f32.mrf.mxu0
    %v573 = vadd.f32 0.0, %v572
    %574 = vmatmul.f32.gmra.mxu0 %v463
    %v575 = vpop.f32.mrf.mxu0
    %v576 = vadd.f32 0.0, %v575
    %577 = vmatmul.f32.gmra.mxu0 %v466
    %v578 = vpop.f32.mrf.mxu0
    %v579 = vadd.f32 0.0, %v578
    %580 = vmatmul.f32.gmra.mxu0 %v469
    %v581 = vpop.f32.mrf.mxu0
    %v582 = vadd.f32 0.0, %v581
    %583 = vmatmul.f32.gmra.mxu0 %v472
    %v584 = vpop.f32.mrf.mxu0
    %v585 = vadd.f32 0.0, %v584
    %586 = vmatmul.f32.gmra.mxu0 %v475
    %v587 = vpop.f32.mrf.mxu0
    %v588 = vadd.f32 0.0, %v587
    %589 = vmatmul.f32.gmra.mxu0 %v478
    %v590 = vpop.f32.mrf.mxu0
    %v591 = vadd.f32 0.0, %v590
    %592 = vmatmul.f32.gmra.mxu0 %v481
    %v593 = vpop.f32.mrf.mxu0
    %v594 = vadd.f32 0.0, %v593
    %595 = vmatmul.f32.gmra.mxu0 %v484
    %v596 = vpop.f32.mrf.mxu0
    %v597 = vadd.f32 0.0, %v596
    %598 = vmatmul.f32.gmra.mxu0 %v487
    %v599 = vpop.f32.mrf.mxu0
    %v600 = vadd.f32 0.0, %v599
    %601 = vmatmul.f32.gmra.mxu0 %v490
    %v602 = vpop.f32.mrf.mxu0
    %v603 = vadd.f32 0.0, %v602
    %604 = vmatmul.f32.gmra.mxu0 %v493
    %v605 = vpop.f32.mrf.mxu0
    %v606 = vadd.f32 0.0, %v605
    %607 = vmatmul.f32.gmra.mxu0 %v496
    %v608 = vpop.f32.mrf.mxu0
    %v609 = vadd.f32 0.0, %v608
    %610 = vmatmul.f32.gmra.mxu0 %v499
    %v611 = vpop.f32.mrf.mxu0
    %v612 = vadd.f32 0.0, %v611
    %613 = vmatmul.f32.gmra.mxu0 %v502
    %v614 = vpop.f32.mrf.mxu0
    %v615 = vadd.f32 0.0, %v614
    %616 = vmatmul.f32.gmra.mxu0 %v505
    %v617 = vpop.f32.mrf.mxu0
    %v618 = vadd.f32 0.0, %v617
    %619 = vmatmul.f32.gmra.mxu0 %v508
    %v620 = vpop.f32.mrf.mxu0
    %v621 = vadd.f32 0.0, %v620
    %622 = vmatmul.f32.gmra.mxu0 %v511
    %v623 = vpop.f32.mrf.mxu0
    %v624 = vadd.f32 0.0, %v623
    %625 = vmatmul.f32.gmra.mxu0 %v514
    %v626 = vpop.f32.mrf.mxu0
    %v627 = vadd.f32 0.0, %v626
    %628 = vmatmul.f32.gmra.mxu0 %v517
    %v629 = vpop.f32.mrf.mxu0
    %v630 = vadd.f32 0.0, %v629
    %631 = vmatmul.f32.gmra.mxu0 %v520
    %v632 = vpop.f32.mrf.mxu0
    %v633 = vadd.f32 0.0, %v632
    %634 = vmatmul.f32.gmra.mxu0 %v523
    %v635 = vpop.f32.mrf.mxu0
    %v636 = vadd.f32 0.0, %v635
    %637 = vmatmul.f32.gmra.mxu0 %v526
    %v638 = vpop.f32.mrf.mxu0
    %v639 = vadd.f32 0.0, %v638
    %640 = vdwg.mxu0
    %v641 = vmul.f32 %v546, %v546
    %v642 = vmul.f32 %v549, %v549
    %v643 = vmul.f32 %v552, %v552
    %v644 = vmul.f32 %v555, %v555
    %v645 = vmul.f32 %v558, %v558
    %v646 = vmul.f32 %v561, %v561
    %v647 = vmul.f32 %v564, %v564
    %v648 = vmul.f32 %v567, %v567
    %v649 = vmul.f32 %v570, %v570
    %v650 = vmul.f32 %v573, %v573
    %v651 = vmul.f32 %v576, %v576
    %v652 = vmul.f32 %v579, %v579
    %v653 = vmul.f32 %v582, %v582
    %v654 = vmul.f32 %v585, %v585
    %v655 = vmul.f32 %v588, %v588
    %v656 = vmul.f32 %v591, %v591
    %v657 = vmul.f32 %v594, %v594
    %v658 = vmul.f32 %v597, %v597
    %v659 = vmul.f32 %v600, %v600
    %v660 = vmul.f32 %v603, %v603
    %v661 = vmul.f32 %v606, %v606
    %v662 = vmul.f32 %v609, %v609
    %v663 = vmul.f32 %v612, %v612
    %v664 = vmul.f32 %v615, %v615
    %v665 = vmul.f32 %v618, %v618
    %v666 = vmul.f32 %v621, %v621
    %v667 = vmul.f32 %v624, %v624
    %v668 = vmul.f32 %v627, %v627
    %v669 = vmul.f32 %v630, %v630
    %v670 = vmul.f32 %v633, %v633
    %v671 = vmul.f32 %v636, %v636
    %v672 = vmul.f32 %v639, %v639
    %vm673 = vcmask 261120
    %v674 = vsel %vm673, %v641, 0.0
    %675 = vadd.xlane.f32.xlu0 %v674
    %v676 = vpop.xlane.xlu0 %675
    %v677 = vsel %vm673, %v642, 0.0
    %678 = vadd.xlane.f32.xlu0 %v677
    %v679 = vpop.xlane.xlu0 %678
    %v680 = vsel %vm673, %v643, 0.0
    %681 = vadd.xlane.f32.xlu0 %v680
    %v682 = vpop.xlane.xlu0 %681
    %v683 = vsel %vm673, %v644, 0.0
    %684 = vadd.xlane.f32.xlu0 %v683
    %v685 = vpop.xlane.xlu0 %684
    %v686 = vsel %vm673, %v645, 0.0
    %687 = vadd.xlane.f32.xlu0 %v686
    %v688 = vpop.xlane.xlu0 %687
    %v689 = vsel %vm673, %v646, 0.0
    %690 = vadd.xlane.f32.xlu0 %v689
    %v691 = vpop.xlane.xlu0 %690
    %v692 = vsel %vm673, %v647, 0.0
    %693 = vadd.xlane.f32.xlu0 %v692
    %v694 = vpop.xlane.xlu0 %693
    %v695 = vsel %vm673, %v648, 0.0
    %696 = vadd.xlane.f32.xlu0 %v695
    %v697 = vpop.xlane.xlu0 %696
    %v698 = vsel %vm673, %v649, 0.0
    %699 = vadd.xlane.f32.xlu0 %v698
    %v700 = vpop.xlane.xlu0 %699
    %v701 = vsel %vm673, %v650, 0.0
    %702 = vadd.xlane.f32.xlu0 %v701
    %v703 = vpop.xlane.xlu0 %702
    %v704 = vsel %vm673, %v651, 0.0
    %705 = vadd.xlane.f32.xlu0 %v704
    %v706 = vpop.xlane.xlu0 %705
    %v707 = vsel %vm673, %v652, 0.0
    %708 = vadd.xlane.f32.xlu0 %v707
    %v709 = vpop.xlane.xlu0 %708
    %v710 = vsel %vm673, %v653, 0.0
    %711 = vadd.xlane.f32.xlu0 %v710
    %v712 = vpop.xlane.xlu0 %711
    %v713 = vsel %vm673, %v654, 0.0
    %714 = vadd.xlane.f32.xlu0 %v713
    %v715 = vpop.xlane.xlu0 %714
    %v716 = vsel %vm673, %v655, 0.0
    %717 = vadd.xlane.f32.xlu0 %v716
    %v718 = vpop.xlane.xlu0 %717
    %v719 = vsel %vm673, %v656, 0.0
    %720 = vadd.xlane.f32.xlu0 %v719
    %v721 = vpop.xlane.xlu0 %720
    %v722 = vsel %vm673, %v657, 0.0
    %723 = vadd.xlane.f32.xlu0 %v722
    %v724 = vpop.xlane.xlu0 %723
    %v725 = vsel %vm673, %v658, 0.0
    %726 = vadd.xlane.f32.xlu0 %v725
    %v727 = vpop.xlane.xlu0 %726
    %v728 = vsel %vm673, %v659, 0.0
    %729 = vadd.xlane.f32.xlu0 %v728
    %v730 = vpop.xlane.xlu0 %729
    %v731 = vsel %vm673, %v660, 0.0
    %732 = vadd.xlane.f32.xlu0 %v731
    %v733 = vpop.xlane.xlu0 %732
    %v734 = vsel %vm673, %v661, 0.0
    %735 = vadd.xlane.f32.xlu0 %v734
    %v736 = vpop.xlane.xlu0 %735
    %v737 = vsel %vm673, %v662, 0.0
    %738 = vadd.xlane.f32.xlu0 %v737
    %v739 = vpop.xlane.xlu0 %738
    %v740 = vsel %vm673, %v663, 0.0
    %741 = vadd.xlane.f32.xlu0 %v740
    %v742 = vpop.xlane.xlu0 %741
    %v743 = vsel %vm673, %v664, 0.0
    %744 = vadd.xlane.f32.xlu0 %v743
    %v745 = vpop.xlane.xlu0 %744
    %v746 = vsel %vm673, %v665, 0.0
    %747 = vadd.xlane.f32.xlu0 %v746
    %v748 = vpop.xlane.xlu0 %747
    %v749 = vsel %vm673, %v666, 0.0
    %750 = vadd.xlane.f32.xlu0 %v749
    %v751 = vpop.xlane.xlu0 %750
    %v752 = vsel %vm673, %v667, 0.0
    %753 = vadd.xlane.f32.xlu0 %v752
    %v754 = vpop.xlane.xlu0 %753
    %v755 = vsel %vm673, %v668, 0.0
    %756 = vadd.xlane.f32.xlu0 %v755
    %v757 = vpop.xlane.xlu0 %756
    %v758 = vsel %vm673, %v669, 0.0
    %759 = vadd.xlane.f32.xlu0 %v758
    %v760 = vpop.xlane.xlu0 %759
    %v761 = vsel %vm673, %v670, 0.0
    %762 = vadd.xlane.f32.xlu0 %v761
    %v763 = vpop.xlane.xlu0 %762
    %v764 = vsel %vm673, %v671, 0.0
    %765 = vadd.xlane.f32.xlu0 %v764
    %v766 = vpop.xlane.xlu0 %765
    %v767 = vsel %vm673, %v672, 0.0
    %768 = vadd.xlane.f32.xlu0 %v767
    %v769 = vpop.xlane.xlu0 %768
    %v770 = vmax.f32 %v676, 1e-24
    %v771 = vmax.f32 %v679, 1e-24
    %v772 = vmax.f32 %v682, 1e-24
    %v773 = vmax.f32 %v685, 1e-24
    %v774 = vmax.f32 %v688, 1e-24
    %v775 = vmax.f32 %v691, 1e-24
    %v776 = vmax.f32 %v694, 1e-24
    %v777 = vmax.f32 %v697, 1e-24
    %v778 = vmax.f32 %v700, 1e-24
    %v779 = vmax.f32 %v703, 1e-24
    %v780 = vmax.f32 %v706, 1e-24
    %v781 = vmax.f32 %v709, 1e-24
    %v782 = vmax.f32 %v712, 1e-24
    %v783 = vmax.f32 %v715, 1e-24
    %v784 = vmax.f32 %v718, 1e-24
    %v785 = vmax.f32 %v721, 1e-24
    %v786 = vmax.f32 %v724, 1e-24
    %v787 = vmax.f32 %v727, 1e-24
    %v788 = vmax.f32 %v730, 1e-24
    %v789 = vmax.f32 %v733, 1e-24
    %v790 = vmax.f32 %v736, 1e-24
    %v791 = vmax.f32 %v739, 1e-24
    %v792 = vmax.f32 %v742, 1e-24
    %v793 = vmax.f32 %v745, 1e-24
    %v794 = vmax.f32 %v748, 1e-24
    %v795 = vmax.f32 %v751, 1e-24
    %v796 = vmax.f32 %v754, 1e-24
    %v797 = vmax.f32 %v757, 1e-24
    %v798 = vmax.f32 %v760, 1e-24
    %v799 = vmax.f32 %v763, 1e-24
    %v800 = vmax.f32 %v766, 1e-24
    %v801 = vmax.f32 %v769, 1e-24
    %v802 = vrsqrt.pop %v770
    %v803 = vmul.f32 %v802, %v770
    %v804 = vmul.f32 %v803, %v802
    %v805 = vmul.f32 0.5, %v804
    %v806 = vsub.f32 1.5, %v805
    %v807 = vmul.f32 %v802, %v806
    %vm808 = vweird.f32 %v770
    %vm809 = vweird.f32 %v802
    %vm810 = vmor %vm808, %vm809
    %v811 = vsel %vm810, %v802, %v807
    %v812 = vrsqrt.pop %v771
    %v813 = vmul.f32 %v812, %v771
    %v814 = vmul.f32 %v813, %v812
    %v815 = vmul.f32 0.5, %v814
    %v816 = vsub.f32 1.5, %v815
    %v817 = vmul.f32 %v812, %v816
    %vm818 = vweird.f32 %v771
    %vm819 = vweird.f32 %v812
    %vm820 = vmor %vm818, %vm819
    %v821 = vsel %vm820, %v812, %v817
    %v822 = vrsqrt.pop %v772
    %v823 = vmul.f32 %v822, %v772
    %v824 = vmul.f32 %v823, %v822
    %v825 = vmul.f32 0.5, %v824
    %v826 = vsub.f32 1.5, %v825
    %v827 = vmul.f32 %v822, %v826
    %vm828 = vweird.f32 %v772
    %vm829 = vweird.f32 %v822
    %vm830 = vmor %vm828, %vm829
    %v831 = vsel %vm830, %v822, %v827
    %v832 = vrsqrt.pop %v773
    %v833 = vmul.f32 %v832, %v773
    %v834 = vmul.f32 %v833, %v832
    %v835 = vmul.f32 0.5, %v834
    %v836 = vsub.f32 1.5, %v835
    %v837 = vmul.f32 %v832, %v836
    %vm838 = vweird.f32 %v773
    %vm839 = vweird.f32 %v832
    %vm840 = vmor %vm838, %vm839
    %v841 = vsel %vm840, %v832, %v837
    %v842 = vrsqrt.pop %v774
    %v843 = vmul.f32 %v842, %v774
    %v844 = vmul.f32 %v843, %v842
    %v845 = vmul.f32 0.5, %v844
    %v846 = vsub.f32 1.5, %v845
    %v847 = vmul.f32 %v842, %v846
    %vm848 = vweird.f32 %v774
    %vm849 = vweird.f32 %v842
    %vm850 = vmor %vm848, %vm849
    %v851 = vsel %vm850, %v842, %v847
    %v852 = vrsqrt.pop %v775
    %v853 = vmul.f32 %v852, %v775
    %v854 = vmul.f32 %v853, %v852
    %v855 = vmul.f32 0.5, %v854
    %v856 = vsub.f32 1.5, %v855
    %v857 = vmul.f32 %v852, %v856
    %vm858 = vweird.f32 %v775
    %vm859 = vweird.f32 %v852
    %vm860 = vmor %vm858, %vm859
    %v861 = vsel %vm860, %v852, %v857
    %v862 = vrsqrt.pop %v776
    %v863 = vmul.f32 %v862, %v776
    %v864 = vmul.f32 %v863, %v862
    %v865 = vmul.f32 0.5, %v864
    %v866 = vsub.f32 1.5, %v865
    %v867 = vmul.f32 %v862, %v866
    %vm868 = vweird.f32 %v776
    %vm869 = vweird.f32 %v862
    %vm870 = vmor %vm868, %vm869
    %v871 = vsel %vm870, %v862, %v867
    %v872 = vrsqrt.pop %v777
    %v873 = vmul.f32 %v872, %v777
    %v874 = vmul.f32 %v873, %v872
    %v875 = vmul.f32 0.5, %v874
    %v876 = vsub.f32 1.5, %v875
    %v877 = vmul.f32 %v872, %v876
    %vm878 = vweird.f32 %v777
    %vm879 = vweird.f32 %v872
    %vm880 = vmor %vm878, %vm879
    %v881 = vsel %vm880, %v872, %v877
    %v882 = vrsqrt.pop %v778
    %v883 = vmul.f32 %v882, %v778
    %v884 = vmul.f32 %v883, %v882
    %v885 = vmul.f32 0.5, %v884
    %v886 = vsub.f32 1.5, %v885
    %v887 = vmul.f32 %v882, %v886
    %vm888 = vweird.f32 %v778
    %vm889 = vweird.f32 %v882
    %vm890 = vmor %vm888, %vm889
    %v891 = vsel %vm890, %v882, %v887
    %v892 = vrsqrt.pop %v779
    %v893 = vmul.f32 %v892, %v779
    %v894 = vmul.f32 %v893, %v892
    %v895 = vmul.f32 0.5, %v894
    %v896 = vsub.f32 1.5, %v895
    %v897 = vmul.f32 %v892, %v896
    %vm898 = vweird.f32 %v779
    %vm899 = vweird.f32 %v892
    %vm900 = vmor %vm898, %vm899
    %v901 = vsel %vm900, %v892, %v897
    %v902 = vrsqrt.pop %v780
    %v903 = vmul.f32 %v902, %v780
    %v904 = vmul.f32 %v903, %v902
    %v905 = vmul.f32 0.5, %v904
    %v906 = vsub.f32 1.5, %v905
    %v907 = vmul.f32 %v902, %v906
    %vm908 = vweird.f32 %v780
    %vm909 = vweird.f32 %v902
    %vm910 = vmor %vm908, %vm909
    %v911 = vsel %vm910, %v902, %v907
    %v912 = vrsqrt.pop %v781
    %v913 = vmul.f32 %v912, %v781
    %v914 = vmul.f32 %v913, %v912
    %v915 = vmul.f32 0.5, %v914
    %v916 = vsub.f32 1.5, %v915
    %v917 = vmul.f32 %v912, %v916
    %vm918 = vweird.f32 %v781
    %vm919 = vweird.f32 %v912
    %vm920 = vmor %vm918, %vm919
    %v921 = vsel %vm920, %v912, %v917
    %v922 = vrsqrt.pop %v782
    %v923 = vmul.f32 %v922, %v782
    %v924 = vmul.f32 %v923, %v922
    %v925 = vmul.f32 0.5, %v924
    %v926 = vsub.f32 1.5, %v925
    %v927 = vmul.f32 %v922, %v926
    %vm928 = vweird.f32 %v782
    %vm929 = vweird.f32 %v922
    %vm930 = vmor %vm928, %vm929
    %v931 = vsel %vm930, %v922, %v927
    %v932 = vrsqrt.pop %v783
    %v933 = vmul.f32 %v932, %v783
    %v934 = vmul.f32 %v933, %v932
    %v935 = vmul.f32 0.5, %v934
    %v936 = vsub.f32 1.5, %v935
    %v937 = vmul.f32 %v932, %v936
    %vm938 = vweird.f32 %v783
    %vm939 = vweird.f32 %v932
    %vm940 = vmor %vm938, %vm939
    %v941 = vsel %vm940, %v932, %v937
    %v942 = vrsqrt.pop %v784
    %v943 = vmul.f32 %v942, %v784
    %v944 = vmul.f32 %v943, %v942
    %v945 = vmul.f32 0.5, %v944
    %v946 = vsub.f32 1.5, %v945
    %v947 = vmul.f32 %v942, %v946
    %vm948 = vweird.f32 %v784
    %vm949 = vweird.f32 %v942
    %vm950 = vmor %vm948, %vm949
    %v951 = vsel %vm950, %v942, %v947
    %v952 = vrsqrt.pop %v785
    %v953 = vmul.f32 %v952, %v785
    %v954 = vmul.f32 %v953, %v952
    %v955 = vmul.f32 0.5, %v954
    %v956 = vsub.f32 1.5, %v955
    %v957 = vmul.f32 %v952, %v956
    %vm958 = vweird.f32 %v785
    %vm959 = vweird.f32 %v952
    %vm960 = vmor %vm958, %vm959
    %v961 = vsel %vm960, %v952, %v957
    %v962 = vrsqrt.pop %v786
    %v963 = vmul.f32 %v962, %v786
    %v964 = vmul.f32 %v963, %v962
    %v965 = vmul.f32 0.5, %v964
    %v966 = vsub.f32 1.5, %v965
    %v967 = vmul.f32 %v962, %v966
    %vm968 = vweird.f32 %v786
    %vm969 = vweird.f32 %v962
    %vm970 = vmor %vm968, %vm969
    %v971 = vsel %vm970, %v962, %v967
    %v972 = vrsqrt.pop %v787
    %v973 = vmul.f32 %v972, %v787
    %v974 = vmul.f32 %v973, %v972
    %v975 = vmul.f32 0.5, %v974
    %v976 = vsub.f32 1.5, %v975
    %v977 = vmul.f32 %v972, %v976
    %vm978 = vweird.f32 %v787
    %vm979 = vweird.f32 %v972
    %vm980 = vmor %vm978, %vm979
    %v981 = vsel %vm980, %v972, %v977
    %v982 = vrsqrt.pop %v788
    %v983 = vmul.f32 %v982, %v788
    %v984 = vmul.f32 %v983, %v982
    %v985 = vmul.f32 0.5, %v984
    %v986 = vsub.f32 1.5, %v985
    %v987 = vmul.f32 %v982, %v986
    %vm988 = vweird.f32 %v788
    %vm989 = vweird.f32 %v982
    %vm990 = vmor %vm988, %vm989
    %v991 = vsel %vm990, %v982, %v987
    %v992 = vrsqrt.pop %v789
    %v993 = vmul.f32 %v992, %v789
    %v994 = vmul.f32 %v993, %v992
    %v995 = vmul.f32 0.5, %v994
    %v996 = vsub.f32 1.5, %v995
    %v997 = vmul.f32 %v992, %v996
    %vm998 = vweird.f32 %v789
    %vm999 = vweird.f32 %v992
    %vm1000 = vmor %vm998, %vm999
    %v1001 = vsel %vm1000, %v992, %v997
    %v1002 = vrsqrt.pop %v790
    %v1003 = vmul.f32 %v1002, %v790
    %v1004 = vmul.f32 %v1003, %v1002
    %v1005 = vmul.f32 0.5, %v1004
    %v1006 = vsub.f32 1.5, %v1005
    %v1007 = vmul.f32 %v1002, %v1006
    %vm1008 = vweird.f32 %v790
    %vm1009 = vweird.f32 %v1002
    %vm1010 = vmor %vm1008, %vm1009
    %v1011 = vsel %vm1010, %v1002, %v1007
    %v1012 = vrsqrt.pop %v791
    %v1013 = vmul.f32 %v1012, %v791
    %v1014 = vmul.f32 %v1013, %v1012
    %v1015 = vmul.f32 0.5, %v1014
    %v1016 = vsub.f32 1.5, %v1015
    %v1017 = vmul.f32 %v1012, %v1016
    %vm1018 = vweird.f32 %v791
    %vm1019 = vweird.f32 %v1012
    %vm1020 = vmor %vm1018, %vm1019
    %v1021 = vsel %vm1020, %v1012, %v1017
    %v1022 = vrsqrt.pop %v792
    %v1023 = vmul.f32 %v1022, %v792
    %v1024 = vmul.f32 %v1023, %v1022
    %v1025 = vmul.f32 0.5, %v1024
    %v1026 = vsub.f32 1.5, %v1025
    %v1027 = vmul.f32 %v1022, %v1026
    %vm1028 = vweird.f32 %v792
    %vm1029 = vweird.f32 %v1022
    %vm1030 = vmor %vm1028, %vm1029
    %v1031 = vsel %vm1030, %v1022, %v1027
    %v1032 = vrsqrt.pop %v793
    %v1033 = vmul.f32 %v1032, %v793
    %v1034 = vmul.f32 %v1033, %v1032
    %v1035 = vmul.f32 0.5, %v1034
    %v1036 = vsub.f32 1.5, %v1035
    %v1037 = vmul.f32 %v1032, %v1036
    %vm1038 = vweird.f32 %v793
    %vm1039 = vweird.f32 %v1032
    %vm1040 = vmor %vm1038, %vm1039
    %v1041 = vsel %vm1040, %v1032, %v1037
    %v1042 = vrsqrt.pop %v794
    %v1043 = vmul.f32 %v1042, %v794
    %v1044 = vmul.f32 %v1043, %v1042
    %v1045 = vmul.f32 0.5, %v1044
    %v1046 = vsub.f32 1.5, %v1045
    %v1047 = vmul.f32 %v1042, %v1046
    %vm1048 = vweird.f32 %v794
    %vm1049 = vweird.f32 %v1042
    %vm1050 = vmor %vm1048, %vm1049
    %v1051 = vsel %vm1050, %v1042, %v1047
    %v1052 = vrsqrt.pop %v795
    %v1053 = vmul.f32 %v1052, %v795
    %v1054 = vmul.f32 %v1053, %v1052
    %v1055 = vmul.f32 0.5, %v1054
    %v1056 = vsub.f32 1.5, %v1055
    %v1057 = vmul.f32 %v1052, %v1056
    %vm1058 = vweird.f32 %v795
    %vm1059 = vweird.f32 %v1052
    %vm1060 = vmor %vm1058, %vm1059
    %v1061 = vsel %vm1060, %v1052, %v1057
    %v1062 = vrsqrt.pop %v796
    %v1063 = vmul.f32 %v1062, %v796
    %v1064 = vmul.f32 %v1063, %v1062
    %v1065 = vmul.f32 0.5, %v1064
    %v1066 = vsub.f32 1.5, %v1065
    %v1067 = vmul.f32 %v1062, %v1066
    %vm1068 = vweird.f32 %v796
    %vm1069 = vweird.f32 %v1062
    %vm1070 = vmor %vm1068, %vm1069
    %v1071 = vsel %vm1070, %v1062, %v1067
    %v1072 = vrsqrt.pop %v797
    %v1073 = vmul.f32 %v1072, %v797
    %v1074 = vmul.f32 %v1073, %v1072
    %v1075 = vmul.f32 0.5, %v1074
    %v1076 = vsub.f32 1.5, %v1075
    %v1077 = vmul.f32 %v1072, %v1076
    %vm1078 = vweird.f32 %v797
    %vm1079 = vweird.f32 %v1072
    %vm1080 = vmor %vm1078, %vm1079
    %v1081 = vsel %vm1080, %v1072, %v1077
    %v1082 = vrsqrt.pop %v798
    %v1083 = vmul.f32 %v1082, %v798
    %v1084 = vmul.f32 %v1083, %v1082
    %v1085 = vmul.f32 0.5, %v1084
    %v1086 = vsub.f32 1.5, %v1085
    %v1087 = vmul.f32 %v1082, %v1086
    %vm1088 = vweird.f32 %v798
    %vm1089 = vweird.f32 %v1082
    %vm1090 = vmor %vm1088, %vm1089
    %v1091 = vsel %vm1090, %v1082, %v1087
    %v1092 = vrsqrt.pop %v799
    %v1093 = vmul.f32 %v1092, %v799
    %v1094 = vmul.f32 %v1093, %v1092
    %v1095 = vmul.f32 0.5, %v1094
    %v1096 = vsub.f32 1.5, %v1095
    %v1097 = vmul.f32 %v1092, %v1096
    %vm1098 = vweird.f32 %v799
    %vm1099 = vweird.f32 %v1092
    %vm1100 = vmor %vm1098, %vm1099
    %v1101 = vsel %vm1100, %v1092, %v1097
    %v1102 = vrsqrt.pop %v800
    %v1103 = vmul.f32 %v1102, %v800
    %v1104 = vmul.f32 %v1103, %v1102
    %v1105 = vmul.f32 0.5, %v1104
    %v1106 = vsub.f32 1.5, %v1105
    %v1107 = vmul.f32 %v1102, %v1106
    %vm1108 = vweird.f32 %v800
    %vm1109 = vweird.f32 %v1102
    %vm1110 = vmor %vm1108, %vm1109
    %v1111 = vsel %vm1110, %v1102, %v1107
    %v1112 = vrsqrt.pop %v801
    %v1113 = vmul.f32 %v1112, %v801
    %v1114 = vmul.f32 %v1113, %v1112
    %v1115 = vmul.f32 0.5, %v1114
    %v1116 = vsub.f32 1.5, %v1115
    %v1117 = vmul.f32 %v1112, %v1116
    %vm1118 = vweird.f32 %v801
    %vm1119 = vweird.f32 %v1112
    %vm1120 = vmor %vm1118, %vm1119
    %v1121 = vsel %vm1120, %v1112, %v1117
    %v1122 = vmul.f32 %v546, %v811
    %v1123 = vmul.f32 %v549, %v821
    %v1124 = vmul.f32 %v552, %v831
    %v1125 = vmul.f32 %v555, %v841
    %v1126 = vmul.f32 %v558, %v851
    %v1127 = vmul.f32 %v561, %v861
    %v1128 = vmul.f32 %v564, %v871
    %v1129 = vmul.f32 %v567, %v881
    %v1130 = vmul.f32 %v570, %v891
    %v1131 = vmul.f32 %v573, %v901
    %v1132 = vmul.f32 %v576, %v911
    %v1133 = vmul.f32 %v579, %v921
    %v1134 = vmul.f32 %v582, %v931
    %v1135 = vmul.f32 %v585, %v941
    %v1136 = vmul.f32 %v588, %v951
    %v1137 = vmul.f32 %v591, %v961
    %v1138 = vmul.f32 %v594, %v971
    %v1139 = vmul.f32 %v597, %v981
    %v1140 = vmul.f32 %v600, %v991
    %v1141 = vmul.f32 %v603, %v1001
    %v1142 = vmul.f32 %v606, %v1011
    %v1143 = vmul.f32 %v609, %v1021
    %v1144 = vmul.f32 %v612, %v1031
    %v1145 = vmul.f32 %v615, %v1041
    %v1146 = vmul.f32 %v618, %v1051
    %v1147 = vmul.f32 %v621, %v1061
    %v1148 = vmul.f32 %v624, %v1071
    %v1149 = vmul.f32 %v627, %v1081
    %v1150 = vmul.f32 %v630, %v1091
    %v1151 = vmul.f32 %v633, %v1101
    %v1152 = vmul.f32 %v636, %v1111
    %v1153 = vmul.f32 %v639, %v1121
    %v1155 = vrot.slane %v140, 1
    %v1156 = vperm.slane %v140, 0
    %v1157 = vperm.slane %v1155, 0
    %v1160 = vmul.f32 %v1156, %v1122
    %v1161 = vmul.f32 %v1156, %v1123
    %v1162 = vmul.f32 %v1156, %v1124
    %v1163 = vmul.f32 %v1156, %v1125
    %v1164 = vmul.f32 %v1156, %v1126
    %v1165 = vmul.f32 %v1156, %v1127
    %v1166 = vmul.f32 %v1156, %v1128
    %v1167 = vmul.f32 %v1156, %v1129
    %v1168 = vmul.f32 %v1156, %v1130
    %v1169 = vmul.f32 %v1156, %v1131
    %v1170 = vmul.f32 %v1156, %v1132
    %v1171 = vmul.f32 %v1156, %v1133
    %v1172 = vmul.f32 %v1156, %v1134
    %v1173 = vmul.f32 %v1156, %v1135
    %v1174 = vmul.f32 %v1156, %v1136
    %v1175 = vmul.f32 %v1156, %v1137
    %v1176 = vmul.f32 %v1157, %v1138
    %v1177 = vmul.f32 %v1157, %v1139
    %v1178 = vmul.f32 %v1157, %v1140
    %v1179 = vmul.f32 %v1157, %v1141
    %v1180 = vmul.f32 %v1157, %v1142
    %v1181 = vmul.f32 %v1157, %v1143
    %v1182 = vmul.f32 %v1157, %v1144
    %v1183 = vmul.f32 %v1157, %v1145
    %v1184 = vmul.f32 %v1157, %v1146
    %v1185 = vmul.f32 %v1157, %v1147
    %v1186 = vmul.f32 %v1157, %v1148
    %v1187 = vmul.f32 %v1157, %v1149
    %v1188 = vmul.f32 %v1157, %v1150
    %v1189 = vmul.f32 %v1157, %v1151
    %v1190 = vmul.f32 %v1157, %v1152
    %v1191 = vmul.f32 %v1157, %v1153
    %v1192 = vsel %vm673, %v1160, 0.0
    %1193 = vadd.xlane.f32.xlu0 %v1192
    %v1194 = vpop.xlane.xlu0 %1193
    %v1195 = vsel %vm673, %v1161, 0.0
    %1196 = vadd.xlane.f32.xlu0 %v1195
    %v1197 = vpop.xlane.xlu0 %1196
    %v1198 = vsel %vm673, %v1162, 0.0
    %1199 = vadd.xlane.f32.xlu0 %v1198
    %v1200 = vpop.xlane.xlu0 %1199
    %v1201 = vsel %vm673, %v1163, 0.0
    %1202 = vadd.xlane.f32.xlu0 %v1201
    %v1203 = vpop.xlane.xlu0 %1202
    %v1204 = vsel %vm673, %v1164, 0.0
    %1205 = vadd.xlane.f32.xlu0 %v1204
    %v1206 = vpop.xlane.xlu0 %1205
    %v1207 = vsel %vm673, %v1165, 0.0
    %1208 = vadd.xlane.f32.xlu0 %v1207
    %v1209 = vpop.xlane.xlu0 %1208
    %v1210 = vsel %vm673, %v1166, 0.0
    %1211 = vadd.xlane.f32.xlu0 %v1210
    %v1212 = vpop.xlane.xlu0 %1211
    %v1213 = vsel %vm673, %v1167, 0.0
    %1214 = vadd.xlane.f32.xlu0 %v1213
    %v1215 = vpop.xlane.xlu0 %1214
    %v1216 = vsel %vm673, %v1168, 0.0
    %1217 = vadd.xlane.f32.xlu0 %v1216
    %v1218 = vpop.xlane.xlu0 %1217
    %v1219 = vsel %vm673, %v1169, 0.0
    %1220 = vadd.xlane.f32.xlu0 %v1219
    %v1221 = vpop.xlane.xlu0 %1220
    %v1222 = vsel %vm673, %v1170, 0.0
    %1223 = vadd.xlane.f32.xlu0 %v1222
    %v1224 = vpop.xlane.xlu0 %1223
    %v1225 = vsel %vm673, %v1171, 0.0
    %1226 = vadd.xlane.f32.xlu0 %v1225
    %v1227 = vpop.xlane.xlu0 %1226
    %v1228 = vsel %vm673, %v1172, 0.0
    %1229 = vadd.xlane.f32.xlu0 %v1228
    %v1230 = vpop.xlane.xlu0 %1229
    %v1231 = vsel %vm673, %v1173, 0.0
    %1232 = vadd.xlane.f32.xlu0 %v1231
    %v1233 = vpop.xlane.xlu0 %1232
    %v1234 = vsel %vm673, %v1174, 0.0
    %1235 = vadd.xlane.f32.xlu0 %v1234
    %v1236 = vpop.xlane.xlu0 %1235
    %v1237 = vsel %vm673, %v1175, 0.0
    %1238 = vadd.xlane.f32.xlu0 %v1237
    %v1239 = vpop.xlane.xlu0 %1238
    %v1240 = vsel %vm673, %v1176, 0.0
    %1241 = vadd.xlane.f32.xlu0 %v1240
    %v1242 = vpop.xlane.xlu0 %1241
    %v1243 = vsel %vm673, %v1177, 0.0
    %1244 = vadd.xlane.f32.xlu0 %v1243
    %v1245 = vpop.xlane.xlu0 %1244
    %v1246 = vsel %vm673, %v1178, 0.0
    %1247 = vadd.xlane.f32.xlu0 %v1246
    %v1248 = vpop.xlane.xlu0 %1247
    %v1249 = vsel %vm673, %v1179, 0.0
    %1250 = vadd.xlane.f32.xlu0 %v1249
    %v1251 = vpop.xlane.xlu0 %1250
    %v1252 = vsel %vm673, %v1180, 0.0
    %1253 = vadd.xlane.f32.xlu0 %v1252
    %v1254 = vpop.xlane.xlu0 %1253
    %v1255 = vsel %vm673, %v1181, 0.0
    %1256 = vadd.xlane.f32.xlu0 %v1255
    %v1257 = vpop.xlane.xlu0 %1256
    %v1258 = vsel %vm673, %v1182, 0.0
    %1259 = vadd.xlane.f32.xlu0 %v1258
    %v1260 = vpop.xlane.xlu0 %1259
    %v1261 = vsel %vm673, %v1183, 0.0
    %1262 = vadd.xlane.f32.xlu0 %v1261
    %v1263 = vpop.xlane.xlu0 %1262
    %v1264 = vsel %vm673, %v1184, 0.0
    %1265 = vadd.xlane.f32.xlu0 %v1264
    %v1266 = vpop.xlane.xlu0 %1265
    %v1267 = vsel %vm673, %v1185, 0.0
    %1268 = vadd.xlane.f32.xlu0 %v1267
    %v1269 = vpop.xlane.xlu0 %1268
    %v1270 = vsel %vm673, %v1186, 0.0
    %1271 = vadd.xlane.f32.xlu0 %v1270
    %v1272 = vpop.xlane.xlu0 %1271
    %v1273 = vsel %vm673, %v1187, 0.0
    %1274 = vadd.xlane.f32.xlu0 %v1273
    %v1275 = vpop.xlane.xlu0 %1274
    %v1276 = vsel %vm673, %v1188, 0.0
    %1277 = vadd.xlane.f32.xlu0 %v1276
    %v1278 = vpop.xlane.xlu0 %1277
    %v1279 = vsel %vm673, %v1189, 0.0
    %1280 = vadd.xlane.f32.xlu0 %v1279
    %v1281 = vpop.xlane.xlu0 %1280
    %v1282 = vsel %vm673, %v1190, 0.0
    %1283 = vadd.xlane.f32.xlu0 %v1282
    %v1284 = vpop.xlane.xlu0 %1283
    %v1285 = vsel %vm673, %v1191, 0.0
    %1286 = vadd.xlane.f32.xlu0 %v1285
    %v1287 = vpop.xlane.xlu0 %1286
    %v1320 = vperm.slane %v1194, %v46
    %v1321 = vadd.s32 %v46, 4294967288
    %v1322 = vperm.slane %v1197, %v1321
    %vm1323 = vcmask 130112
    %v1324 = vsel %vm1323, %v1322, %v1320
    %v1325 = vadd.s32 %v46, 4294967280
    %v1326 = vperm.slane %v1200, %v1325
    %vm1327 = vcmask 195712
    %v1328 = vsel %vm1327, %v1326, %v1324
    %v1329 = vadd.s32 %v46, 4294967272
    %v1330 = vperm.slane %v1203, %v1329
    %vm1331 = vcmask 261312
    %v1332 = vsel %vm1331, %v1330, %v1328
    %v1333 = vadd.s32 %v46, 4294967264
    %v1334 = vperm.slane %v1206, %v1333
    %vm1335 = vcmask 326912
    %v1336 = vsel %vm1335, %v1334, %v1332
    %v1337 = vadd.s32 %v46, 4294967256
    %v1338 = vperm.slane %v1209, %v1337
    %vm1339 = vcmask 392512
    %v1340 = vsel %vm1339, %v1338, %v1336
    %v1341 = vadd.s32 %v46, 4294967248
    %v1342 = vperm.slane %v1212, %v1341
    %vm1343 = vcmask 458112
    %v1344 = vsel %vm1343, %v1342, %v1340
    %v1345 = vadd.s32 %v46, 4294967240
    %v1346 = vperm.slane %v1215, %v1345
    %vm1347 = vcmask 523712
    %v1348 = vsel %vm1347, %v1346, %v1344
    %v1349 = vadd.s32 %v46, 4294967232
    %v1350 = vperm.slane %v1218, %v1349
    %vm1351 = vcmask 589312
    %v1352 = vsel %vm1351, %v1350, %v1348
    %v1353 = vadd.s32 %v46, 4294967224
    %v1354 = vperm.slane %v1221, %v1353
    %vm1355 = vcmask 654912
    %v1356 = vsel %vm1355, %v1354, %v1352
    %v1357 = vadd.s32 %v46, 4294967216
    %v1358 = vperm.slane %v1224, %v1357
    %vm1359 = vcmask 720512
    %v1360 = vsel %vm1359, %v1358, %v1356
    %v1361 = vadd.s32 %v46, 4294967208
    %v1362 = vperm.slane %v1227, %v1361
    %vm1363 = vcmask 786112
    %v1364 = vsel %vm1363, %v1362, %v1360
    %v1365 = vadd.s32 %v46, 4294967200
    %v1366 = vperm.slane %v1230, %v1365
    %vm1367 = vcmask 851712
    %v1368 = vsel %vm1367, %v1366, %v1364
    %v1369 = vadd.s32 %v46, 4294967192
    %v1370 = vperm.slane %v1233, %v1369
    %vm1371 = vcmask 917312
    %v1372 = vsel %vm1371, %v1370, %v1368
    %v1373 = vadd.s32 %v46, 4294967184
    %v1374 = vperm.slane %v1236, %v1373
    %vm1375 = vcmask 982912
    %v1376 = vsel %vm1375, %v1374, %v1372
    %v1377 = vadd.s32 %v46, 4294967176
    %v1378 = vperm.slane %v1239, %v1377
    %vm1379 = vcmask 1048512
    %v1380 = vsel %vm1379, %v1378, %v1376
    %v1381 = vperm.slane %v1242, %v46
    %v1382 = vperm.slane %v1245, %v1321
    %v1383 = vsel %vm1323, %v1382, %v1381
    %v1384 = vperm.slane %v1248, %v1325
    %v1385 = vsel %vm1327, %v1384, %v1383
    %v1386 = vperm.slane %v1251, %v1329
    %v1387 = vsel %vm1331, %v1386, %v1385
    %v1388 = vperm.slane %v1254, %v1333
    %v1389 = vsel %vm1335, %v1388, %v1387
    %v1390 = vperm.slane %v1257, %v1337
    %v1391 = vsel %vm1339, %v1390, %v1389
    %v1392 = vperm.slane %v1260, %v1341
    %v1393 = vsel %vm1343, %v1392, %v1391
    %v1394 = vperm.slane %v1263, %v1345
    %v1395 = vsel %vm1347, %v1394, %v1393
    %v1396 = vperm.slane %v1266, %v1349
    %v1397 = vsel %vm1351, %v1396, %v1395
    %v1398 = vperm.slane %v1269, %v1353
    %v1399 = vsel %vm1355, %v1398, %v1397
    %v1400 = vperm.slane %v1272, %v1357
    %v1401 = vsel %vm1359, %v1400, %v1399
    %v1402 = vperm.slane %v1275, %v1361
    %v1403 = vsel %vm1363, %v1402, %v1401
    %v1404 = vperm.slane %v1278, %v1365
    %v1405 = vsel %vm1367, %v1404, %v1403
    %v1406 = vperm.slane %v1281, %v1369
    %v1407 = vsel %vm1371, %v1406, %v1405
    %v1408 = vperm.slane %v1284, %v1373
    %v1409 = vsel %vm1375, %v1408, %v1407
    %v1410 = vperm.slane %v1287, %v1377
    %v1411 = vsel %vm1379, %v1410, %v1409
    %v1412 = vsel %vm96, %v1411, %v1380
    %1414 = vst [vmem:[#allocation2] sm:$0x3] %v1412
    // Predicated region
    $region14: #{tpu_custom_call.1} parent=1 // pred_check
      _
    $region15: #{tpu_custom_call.1} parent=1 // pred_check_branch
      %1416 = sbr.rel (0) target = $region17
    $region16: #{tpu_custom_call.1} parent=1 // pred_region
      %1418 = vsyncadd [#allocation3], 0
      %s1420 = sshll.u32 [#allocation2], 4
      %s1421 = int_to_ptr.vmem [resolvable:$true] %s1420
      %s1422 = sshll.u32 %s3, 4
      %s1423 = int_to_ptr.hbm [resolvable:$true] %s1422
      %1425 = dma.vmem_to_hbm [thread:$0]  %s1421, 32, %s1423, [#allocation3]
    $region17: #{tpu_custom_call.1} parent=1 // pred_fallthru
      _
    // Predicated region
    $region18: #{tpu_custom_call.1} parent=1 // pred_check
      _
    $region19: #{tpu_custom_call.1} parent=1 // pred_check_branch
      %1427 = sbr.rel (0) target = $region21
    $region20: #{tpu_custom_call.1} parent=1 // pred_region
      %1429 = dma.done [#allocation3], 32
    $region21: #{tpu_custom_call.1} parent=1 // pred_fallthru
      _
    %1430 = vsyncpa [#allocation3], 1

</llo_original>
